<compile_context>
chip_gen: v5e
topology: v5e:2x2
jax: 0.10.0
libtpu: 0.0.40
codegen_flags: <defaults>
</compile_context>

<pallas_src>
import jax
import jax.numpy as jnp
from jax.experimental import pallas as pl
from jax.experimental.pallas import tpu as pltpu


def _add_kernel(a_ref, b_ref, o_ref):
    # Hot path: single VPU elementwise add over the whole VMEM tile.
    o_ref[...] = a_ref[...] + b_ref[...]


def _lane_dense_slab(shape):
    """Pick a lane-dense 2D slab (rows, cols) for `shape`'s element count."""
    total = 1
    for d in shape:
        total *= int(d)
    if total % 128 == 0:
        # Every row is a full 128-lane vreg row -> unmasked vector stores.
        return (total // 128, 128)
    # Fallback for sizes not divisible by 128: prefer the largest divisor that
    # is a multiple of 128 (fully lane-dense), else the largest divisor >= 128,
    # to avoid a 1xN layout (1 of 8 sublanes used + lane-masked partial ops).
    best = None
    for cols in range(min(total, 4096), 127, -1):
        if total % cols == 0:
            if cols % 128 == 0:
                return (total // cols, cols)
            if best is None:
                best = cols
    if best is not None:
        return (total // best, best)
    # Tiny / prime element counts: a single-row full-array block is still legal.
    return (1, total)


@jax.jit
def pallas_add(x318, x303):
    assert x318.shape == x303.shape and x318.dtype == x303.dtype
    orig_shape = x318.shape
    slab = _lane_dense_slab(orig_shape)
    total = slab[0] * slab[1]
    itemsize = x318.dtype.itemsize

    # Contiguous reshape to the lane-dense slab (free; no data movement).
    a2d = x318.reshape(slab)
    b2d = x303.reshape(slab)

    out2d = pl.pallas_call(
        _add_kernel,
        out_shape=jax.ShapeDtypeStruct(slab, x318.dtype),
        # No grid: 3 x ~125 KB fits trivially in VMEM on v5e/v6e/v7x, so a
        # single full-array block (one DMA in per input, one DMA out) is
        # optimal; splitting would only add per-step dispatch overhead.
        in_specs=[
            pl.BlockSpec(memory_space=pltpu.MemorySpace.VMEM),
            pl.BlockSpec(memory_space=pltpu.MemorySpace.VMEM),
        ],
        out_specs=pl.BlockSpec(memory_space=pltpu.MemorySpace.VMEM),
        # Let XLA fuse elementwise producers of either operand into the reads.
        compiler_params=pltpu.CompilerParams(allow_input_fusion=[0, 1]),
        # Scheduler hint: 1 add per element, 2 reads + 1 write per element.
        cost_estimate=pl.CostEstimate(
            flops=total,
            transcendentals=0,
            bytes_accessed=3 * total * itemsize,
        ),
    )(a2d, b2d)

    return out2d.reshape(orig_shape)


if __name__ == "__main__":
    key = jax.random.PRNGKey(0)
    k1, k2 = jax.random.split(key)
    # Shapes implied by the module's forward: (1, 160, 14, 14).
    x318 = jax.random.normal(k1, (1, 160, 14, 14), dtype=jnp.float32)
    x303 = jax.random.normal(k2, (1, 160, 14, 14), dtype=jnp.float32)

    out = pallas_add(x318, x303)
    jax.block_until_ready(out)

    # Sanity check against plain JAX reference.
    ref = x318 + x303
    assert out.shape == ref.shape
    assert jnp.allclose(out, ref, atol=1e-6), "mismatch vs reference add"
    print("KERNEL_OK")
</pallas_src>

<mosaic_0001>
module attributes {stable_mosaic.version = 11 : i64} {
  func.func @_add_kernel(%arg0: memref<245x128xf32, #tpu.memory_space<vmem>>, %arg1: memref<245x128xf32, #tpu.memory_space<vmem>>, %arg2: memref<245x128xf32, #tpu.memory_space<vmem>>) attributes {dimension_semantics = [], scalar_prefetch = 0 : i64, scratch_operands = 0 : i64, tpu.core_type = #tpu.core_type<tc>} {
    %c0 = arith.constant 0 : index
    %c0_0 = arith.constant 0 : index
    %0 = vector.load %arg0[%c0, %c0_0] : memref<245x128xf32, #tpu.memory_space<vmem>>, vector<245x128xf32>
    %c0_1 = arith.constant 0 : index
    %c0_2 = arith.constant 0 : index
    %1 = vector.load %arg1[%c0_1, %c0_2] : memref<245x128xf32, #tpu.memory_space<vmem>>, vector<245x128xf32>
    %2 = arith.addf %0, %1 : vector<245x128xf32>
    %c0_3 = arith.constant 0 : index
    %c0_4 = arith.constant 0 : index
    %3 = vector.load %arg2[%c0_3, %c0_4] : memref<245x128xf32, #tpu.memory_space<vmem>>, vector<245x128xf32>
    tpu.vector_store %arg2[%c0_3, %c0_4], %2 {strides = array<i32>} : memref<245x128xf32, #tpu.memory_space<vmem>>, vector<245x128xf32>,
    return
  }
}

</mosaic_0001>

<llo_original>
// kernel: pallas_add.1
$region0: #{pallas_add.1}
  #allocation0 [shape = 'u32[]', space=smem, size = 0x4, offset = 0x4, fixed_abs, tag = 'smem constant byte address 0x4 - core index']
  #allocation1 [shape = 'u32[72,128]{1,0:T(1,128)}', space=vmem, size = 0x9000, scoped, tag = 'internal scratch']
  %s0 = inlined_call_operand.vmem [shape: f32[245,128], index: 0, kind: input, shape index: {}]
  %s1 = inlined_call_operand.vmem [shape: f32[245,128], index: 1, kind: input, shape index: {}]
  %s2 = inlined_call_operand.vmem [shape: f32[245,128], index: 2, kind: output, shape index: {}]
  %s3 = sld [smem:[#allocation0]]
  $region18: #{pallas_add.1} parent=0
    _
  %s5 = ssub.s32 1, %s3
  %s6 = scalar_select 0, %s5, %s3
  // Predicated region
  $region2: #{pallas_add.1} parent=0 // pred_check
    _
  $region3: #{pallas_add.1} parent=0 // pred_check_branch
    %8 = sbr.rel (0) target = $region5
  $region4: #{pallas_add.1} parent=0 // pred_region
    _
  $region5: #{pallas_add.1} parent=0 // pred_fallthru
    _
  // Predicated region
  $region6: #{pallas_add.1} parent=0 // pred_check
    _
  $region7: #{pallas_add.1} parent=0 // pred_check_branch
    %10 = sbr.rel (0) target = $region9
  $region8: #{pallas_add.1} parent=0 // pred_region
    _
  $region9: #{pallas_add.1} parent=0 // pred_fallthru
    _
  %v11 = vld [vmem:[%s0] sm:$0xff]
  %v12 = vld [vmem:[%s0 + $0x8] sm:$0xff]
  %v13 = vld [vmem:[%s0 + $0x10] sm:$0xff]
  %v14 = vld [vmem:[%s0 + $0x18] sm:$0xff]
  %v15 = vld [vmem:[%s0 + $0x20] sm:$0xff]
  %v16 = vld [vmem:[%s0 + $0x28] sm:$0xff]
  %v17 = vld [vmem:[%s0 + $0x30] sm:$0xff]
  %v18 = vld [vmem:[%s0 + $0x38] sm:$0xff]
  %v19 = vld [vmem:[%s0 + $0x40] sm:$0xff]
  %v20 = vld [vmem:[%s0 + $0x48] sm:$0xff]
  %v21 = vld [vmem:[%s0 + $0x50] sm:$0xff]
  %v22 = vld [vmem:[%s0 + $0x58] sm:$0xff]
  %v23 = vld [vmem:[%s0 + $0x60] sm:$0xff]
  %v24 = vld [vmem:[%s0 + $0x68] sm:$0xff]
  %v25 = vld [vmem:[%s0 + $0x70] sm:$0xff]
  %v26 = vld [vmem:[%s0 + $0x78] sm:$0xff]
  %v27 = vld [vmem:[%s0 + $0x80] sm:$0xff]
  %v28 = vld [vmem:[%s0 + $0x88] sm:$0xff]
  %v29 = vld [vmem:[%s0 + $0x90] sm:$0xff]
  %v30 = vld [vmem:[%s0 + $0x98] sm:$0xff]
  %v31 = vld [vmem:[%s0 + $0xa0] sm:$0xff]
  %v32 = vld [vmem:[%s0 + $0xa8] sm:$0xff]
  %v33 = vld [vmem:[%s0 + $0xb0] sm:$0xff]
  %v34 = vld [vmem:[%s0 + $0xb8] sm:$0xff]
  %v35 = vld [vmem:[%s0 + $0xc0] sm:$0xff]
  %v36 = vld [vmem:[%s0 + $0xc8] sm:$0xff]
  %v37 = vld [vmem:[%s0 + $0xd0] sm:$0xff]
  %v38 = vld [vmem:[%s0 + $0xd8] sm:$0xff]
  %v39 = vld [vmem:[%s0 + $0xe0] sm:$0xff]
  %v40 = vld [vmem:[%s0 + $0xe8] sm:$0xff]
  %v41 = vld [vmem:[%s0 + $0xf0] sm:$0x1f]
  %v42 = vld [vmem:[%s1] sm:$0xff]
  %v43 = vld [vmem:[%s1 + $0x8] sm:$0xff]
  %v44 = vld [vmem:[%s1 + $0x10] sm:$0xff]
  %v45 = vld [vmem:[%s1 + $0x18] sm:$0xff]
  %v46 = vld [vmem:[%s1 + $0x20] sm:$0xff]
  %v47 = vld [vmem:[%s1 + $0x28] sm:$0xff]
  %v48 = vld [vmem:[%s1 + $0x30] sm:$0xff]
  %v49 = vld [vmem:[%s1 + $0x38] sm:$0xff]
  %v50 = vld [vmem:[%s1 + $0x40] sm:$0xff]
  %v51 = vld [vmem:[%s1 + $0x48] sm:$0xff]
  %v52 = vld [vmem:[%s1 + $0x50] sm:$0xff]
  %v53 = vld [vmem:[%s1 + $0x58] sm:$0xff]
  %v54 = vld [vmem:[%s1 + $0x60] sm:$0xff]
  %v55 = vld [vmem:[%s1 + $0x68] sm:$0xff]
  %v56 = vld [vmem:[%s1 + $0x70] sm:$0xff]
  %v57 = vld [vmem:[%s1 + $0x78] sm:$0xff]
  %v58 = vld [vmem:[%s1 + $0x80] sm:$0xff]
  %v59 = vld [vmem:[%s1 + $0x88] sm:$0xff]
  %v60 = vld [vmem:[%s1 + $0x90] sm:$0xff]
  %v61 = vld [vmem:[%s1 + $0x98] sm:$0xff]
  %v62 = vld [vmem:[%s1 + $0xa0] sm:$0xff]
  %v63 = vld [vmem:[%s1 + $0xa8] sm:$0xff]
  %v64 = vld [vmem:[%s1 + $0xb0] sm:$0xff]
  %v65 = vld [vmem:[%s1 + $0xb8] sm:$0xff]
  %v66 = vld [vmem:[%s1 + $0xc0] sm:$0xff]
  %v67 = vld [vmem:[%s1 + $0xc8] sm:$0xff]
  %v68 = vld [vmem:[%s1 + $0xd0] sm:$0xff]
  %v69 = vld [vmem:[%s1 + $0xd8] sm:$0xff]
  %v70 = vld [vmem:[%s1 + $0xe0] sm:$0xff]
  %v71 = vld [vmem:[%s1 + $0xe8] sm:$0xff]
  %v72 = vld [vmem:[%s1 + $0xf0] sm:$0x1f]
  %v73 = vadd.f32 %v11, %v42
  %v74 = vadd.f32 %v12, %v43
  %v75 = vadd.f32 %v13, %v44
  %v76 = vadd.f32 %v14, %v45
  %v77 = vadd.f32 %v15, %v46
  %v78 = vadd.f32 %v16, %v47
  %v79 = vadd.f32 %v17, %v48
  %v80 = vadd.f32 %v18, %v49
  %v81 = vadd.f32 %v19, %v50
  %v82 = vadd.f32 %v20, %v51
  %v83 = vadd.f32 %v21, %v52
  %v84 = vadd.f32 %v22, %v53
  %v85 = vadd.f32 %v23, %v54
  %v86 = vadd.f32 %v24, %v55
  %v87 = vadd.f32 %v25, %v56
  %v88 = vadd.f32 %v26, %v57
  %v89 = vadd.f32 %v27, %v58
  %v90 = vadd.f32 %v28, %v59
  %v91 = vadd.f32 %v29, %v60
  %v92 = vadd.f32 %v30, %v61
  %v93 = vadd.f32 %v31, %v62
  %v94 = vadd.f32 %v32, %v63
  %v95 = vadd.f32 %v33, %v64
  %v96 = vadd.f32 %v34, %v65
  %v97 = vadd.f32 %v35, %v66
  %v98 = vadd.f32 %v36, %v67
  %v99 = vadd.f32 %v37, %v68
  %v100 = vadd.f32 %v38, %v69
  %v101 = vadd.f32 %v39, %v70
  %v102 = vadd.f32 %v40, %v71
  %v103 = vadd.f32 %v41, %v72
  %104 = vst [vmem:[%s2] sm:$0xff] %v73
  %105 = vst [vmem:[%s2 + $0x8] sm:$0xff] %v74
  %106 = vst [vmem:[%s2 + $0x10] sm:$0xff] %v75
  %107 = vst [vmem:[%s2 + $0x18] sm:$0xff] %v76
  %108 = vst [vmem:[%s2 + $0x20] sm:$0xff] %v77
  %109 = vst [vmem:[%s2 + $0x28] sm:$0xff] %v78
  %110 = vst [vmem:[%s2 + $0x30] sm:$0xff] %v79
  %111 = vst [vmem:[%s2 + $0x38] sm:$0xff] %v80
  %112 = vst [vmem:[%s2 + $0x40] sm:$0xff] %v81
  %113 = vst [vmem:[%s2 + $0x48] sm:$0xff] %v82
  %114 = vst [vmem:[%s2 + $0x50] sm:$0xff] %v83
  %115 = vst [vmem:[%s2 + $0x58] sm:$0xff] %v84
  %116 = vst [vmem:[%s2 + $0x60] sm:$0xff] %v85
  %117 = vst [vmem:[%s2 + $0x68] sm:$0xff] %v86
  %118 = vst [vmem:[%s2 + $0x70] sm:$0xff] %v87
  %119 = vst [vmem:[%s2 + $0x78] sm:$0xff] %v88
  %120 = vst [vmem:[%s2 + $0x80] sm:$0xff] %v89
  %121 = vst [vmem:[%s2 + $0x88] sm:$0xff] %v90
  %122 = vst [vmem:[%s2 + $0x90] sm:$0xff] %v91
  %123 = vst [vmem:[%s2 + $0x98] sm:$0xff] %v92
  %124 = vst [vmem:[%s2 + $0xa0] sm:$0xff] %v93
  %125 = vst [vmem:[%s2 + $0xa8] sm:$0xff] %v94
  %126 = vst [vmem:[%s2 + $0xb0] sm:$0xff] %v95
  %127 = vst [vmem:[%s2 + $0xb8] sm:$0xff] %v96
  %128 = vst [vmem:[%s2 + $0xc0] sm:$0xff] %v97
  %129 = vst [vmem:[%s2 + $0xc8] sm:$0xff] %v98
  %130 = vst [vmem:[%s2 + $0xd0] sm:$0xff] %v99
  %131 = vst [vmem:[%s2 + $0xd8] sm:$0xff] %v100
  %132 = vst [vmem:[%s2 + $0xe0] sm:$0xff] %v101
  %133 = vst [vmem:[%s2 + $0xe8] sm:$0xff] %v102
  %134 = vst [vmem:[%s2 + $0xf0] sm:$0x1f] %v103
  // Predicated region
  $region10: #{pallas_add.1} parent=0 // pred_check
    _
  $region11: #{pallas_add.1} parent=0 // pred_check_branch
    %136 = sbr.rel (0) target = $region13
  $region12: #{pallas_add.1} parent=0 // pred_region
    _
  $region13: #{pallas_add.1} parent=0 // pred_fallthru
    _
  // Predicated region
  $region14: #{pallas_add.1} parent=0 // pred_check
    _
  $region15: #{pallas_add.1} parent=0 // pred_check_branch
    %138 = sbr.rel (0) target = $region17
  $region16: #{pallas_add.1} parent=0 // pred_region
    _
  $region17: #{pallas_add.1} parent=0 // pred_fallthru
    _

</llo_original>
